<compile_context>
chip_gen: v7x
topology: tpu7x:2x2x1
jax: 0.10.0
libtpu: 0.0.40
codegen_flags: <defaults>
</compile_context>

<pallas_src>
import jax
import jax.numpy as jnp
from jax.experimental import pallas as pl
from jax.experimental.pallas import tpu as pltpu

LANE = 128
_DEFAULT_TILE_B = 131072        # ~128K lanes (review: raise default to 64K-128K)
_SMALL_VMEM_TILE_CAP = 131072   # v7x-class (64 MiB VMEM/TC): ~24 MiB per step
_LARGE_VMEM_TILE_CAP = 262144   # v5e/v6e (128 MiB VMEM): allow bigger tiles


def _round_up(n, m):
    return ((n + m - 1) // m) * m


def _cdiv(a, b):
    return (a + b - 1) // b


def _vmem_capacity_bytes():
    """Best-effort VMEM capacity query; conservative (v7x-sized) fallback."""
    try:
        return int(pltpu.get_tpu_info().vmem_capacity_bytes)
    except Exception:
        return 64 << 20


def mlp_kernel(xt_ref, w1_ref, b1_ref, w2_ref, b2_ref, o_ref):
    # xt: (in_dim, TILE_B)   lane-dense batch tile (f32 or bf16 at HBM boundary)
    # w1: (hidden, in_dim)   PyTorch-style weight, VMEM-resident
    # b1: (hidden, 1)        broadcast across lanes
    # w2: (hidden, 1)        second-layer weight as a column
    # b2: (1, 1)
    # o : (1, TILE_B)        f32, lane-dense
    h = jnp.dot(w1_ref[...], xt_ref[...], preferred_element_type=jnp.float32)  # (hidden, TILE_B)
    h = jnp.maximum(h + b1_ref[...], 0.0)                                      # fused bias + ReLU
    # Layer 2 (16 -> 1): VPU multiply + sublane reduction — rides for free under
    # the DMA; no second MXU pass / MRF drain.
    out = jnp.sum(h * w2_ref[...], axis=0, keepdims=True) + b2_ref[...]        # (1, TILE_B)
    o_ref[...] = out.astype(o_ref.dtype)


def simple_regressor(x, w1, b1, w2, b2, *, tile_b=None, compute_dtype=None,
                     x_is_feature_major=False):
    """Fused forward pass of SimpleRegressor.

    x:  (B, input_dim), or (input_dim, B) if x_is_feature_major=True
    w1: (hidden_dim, input_dim)   b1: (hidden_dim,)    (PyTorch nn.Linear layout)
    w2: (1, hidden_dim)           b2: (1,)
    compute_dtype: dtype x/w1 are streamed in at the HBM boundary (e.g. bf16);
                   accumulation is always f32. Default: x.dtype.
    returns: (B, 1) float32
    """
    if x_is_feature_major:
        in_dim, B = x.shape
    else:
        B, in_dim = x.shape
    hidden = w1.shape[0]
    compute_dtype = jnp.dtype(compute_dtype) if compute_dtype is not None else jnp.dtype(x.dtype)
    itemsize = compute_dtype.itemsize

    # ---- Tile selection (review items 1, 4, 5, 6, 10) -----------------------
    vmem_cap = _vmem_capacity_bytes()
    small_vmem = vmem_cap <= (80 << 20)                 # v7x-class part
    tile_cap = _SMALL_VMEM_TILE_CAP if small_vmem else _LARGE_VMEM_TILE_CAP
    tile = _DEFAULT_TILE_B if tile_b is None else int(tile_b)
    tile = max(LANE, _round_up(tile, LANE))             # force multiple of 128
    tile = min(tile, tile_cap)

    Bp = _round_up(B, LANE)                             # pad only to a lane tile
    n_steps = _cdiv(Bp, tile)
    if small_vmem:
        # 2 TensorCores on v7x: keep >= 2 grid steps so the "parallel" batch
        # axis can be sharded across both cores.
        n_steps = max(n_steps, min(2, Bp // LANE))
    tile = _round_up(_cdiv(Bp, n_steps), LANE)          # even split of the grid
    Bp = n_steps * tile                                 # pad waste < 128 / step

    # ---- Layout plumbing (single fused pass, or zero-copy) ------------------
    pad = Bp - B
    if x_is_feature_major:
        xt = x.astype(compute_dtype)                    # zero-copy if dtype matches
        if pad:
            xt = jnp.pad(xt, ((0, 0), (0, pad)))
    else:
        # One fused XLA copy: transpose (+ optional downcast) (+ pad).
        xt = jnp.transpose(x).astype(compute_dtype)
        if pad:
            xt = jnp.pad(xt, ((0, 0), (0, pad)))

    w1_c = w1.astype(compute_dtype)
    b1_col = b1.reshape(hidden, 1).astype(jnp.float32)
    w2_col = jnp.transpose(w2).reshape(hidden, 1).astype(jnp.float32)
    b2_sc = b2.reshape(1, 1).astype(jnp.float32)

    # ---- VMEM budget + cost estimate (review items 5, 6, 7) -----------------
    # Per grid step (sublane-padded to 8 rows): x double-buffered, f32 out
    # double-buffered, plus the (hidden, tile) f32 matmul/ReLU temporary.
    bytes_per_lane = 2 * 8 * itemsize + 2 * 8 * 4 + max(hidden, 8) * 4
    vmem_need = bytes_per_lane * tile + (2 << 20)
    vmem_limit = int(min(max(vmem_need, 8 << 20), vmem_cap - (4 << 20)))

    cost = pl.CostEstimate(
        flops=int(Bp) * (2 * in_dim * hidden + 4 * hidden + 1),
        transcendentals=0,
        bytes_accessed=int(Bp) * (in_dim * itemsize + 4)
        + w1_c.size * itemsize + (2 * hidden + 1) * 4,
    )

    # ---- Kernel launch -------------------------------------------------------
    out_t = pl.pallas_call(
        mlp_kernel,
        out_shape=jax.ShapeDtypeStruct((1, Bp), jnp.float32),
        grid=(n_steps,),
        in_specs=[
            pl.BlockSpec((in_dim, tile), lambda i: (0, i)),   # x: tiled over lanes
            pl.BlockSpec((hidden, in_dim), lambda i: (0, 0)), # weights: VMEM-resident
            pl.BlockSpec((hidden, 1), lambda i: (0, 0)),
            pl.BlockSpec((hidden, 1), lambda i: (0, 0)),
            pl.BlockSpec((1, 1), lambda i: (0, 0)),
        ],
        out_specs=pl.BlockSpec((1, tile), lambda i: (0, i)),  # lane-dense output
        compiler_params=pltpu.CompilerParams(
            dimension_semantics=("parallel",),
            vmem_limit_bytes=vmem_limit,
        ),
        cost_estimate=cost,
    )(xt, w1_c, b1_col, w2_col, b2_sc)

    # NOTE: padded lanes [B:Bp] hold relu(b1)·w2 + b2 garbage — always strip
    # them (cheap slice) before any downstream reduction over the batch axis.
    return out_t[0, :B].reshape(B, 1)                   # no transpose epilogue


def init_params(key, input_dim=2, hidden_dim=16):
    """Deterministic init mimicking PyTorch nn.Linear default (uniform +/- 1/sqrt(fan_in))."""
    k1, k2, k3, k4 = jax.random.split(key, 4)
    bound1 = 1.0 / jnp.sqrt(input_dim)
    bound2 = 1.0 / jnp.sqrt(hidden_dim)
    w1 = jax.random.uniform(k1, (hidden_dim, input_dim), jnp.float32, -bound1, bound1)
    b1 = jax.random.uniform(k2, (hidden_dim,), jnp.float32, -bound1, bound1)
    w2 = jax.random.uniform(k3, (1, hidden_dim), jnp.float32, -bound2, bound2)
    b2 = jax.random.uniform(k4, (1,), jnp.float32, -bound2, bound2)
    return w1, b1, w2, b2


if __name__ == "__main__":
    key = jax.random.PRNGKey(0)
    k_x, k_p, k_x2 = jax.random.split(key, 3)

    batch, input_dim, hidden_dim = 8, 2, 16
    x = jax.random.normal(k_x, (batch, input_dim), jnp.float32)
    w1, b1, w2, b2 = init_params(k_p, input_dim, hidden_dim)

    # PyTorch semantics reference: relu(x @ W1.T + b1) @ W2.T + b2
    ref = jnp.maximum(x @ w1.T + b1, 0.0) @ w2.T + b2

    # 1) Default f32 path (exact).
    out = jax.block_until_ready(simple_regressor(x, w1, b1, w2, b2))
    assert out.shape == (batch, 1)
    assert jnp.allclose(out, ref, atol=1e-5, rtol=1e-5)

    # 2) Zero-copy feature-major input path.
    out_fm = jax.block_until_ready(
        simple_regressor(jnp.transpose(x), w1, b1, w2, b2, x_is_feature_major=True))
    assert out_fm.shape == (batch, 1)
    assert jnp.allclose(out_fm, ref, atol=1e-5, rtol=1e-5)

    # 3) Non-multiple-of-128 batch + bf16 streaming of x/w1 at the HBM boundary
    #    (f32 accumulation inside the kernel). Compare against a reference that
    #    applies the same bf16 input rounding.
    batch2 = 1000
    x2 = jax.random.normal(k_x2, (batch2, input_dim), jnp.float32)
    x2b = x2.astype(jnp.bfloat16).astype(jnp.float32)
    w1b = w1.astype(jnp.bfloat16).astype(jnp.float32)
    ref2 = jnp.maximum(x2b @ w1b.T + b1, 0.0) @ w2.T + b2
    out2 = jax.block_until_ready(
        simple_regressor(x2, w1, b1, w2, b2, compute_dtype=jnp.bfloat16))
    assert out2.shape == (batch2, 1)
    assert jnp.allclose(out2, ref2, atol=1e-4, rtol=1e-4)

    print("KERNEL_OK")
</pallas_src>

<mosaic_0001>
module attributes {stable_mosaic.version = 11 : i64} {
  func.func @mlp_kernel(%arg0: i32, %arg1: memref<2x128xf32, #tpu.memory_space<vmem>>, %arg2: memref<16x2xf32, #tpu.memory_space<vmem>>, %arg3: memref<16x1xf32, #tpu.memory_space<vmem>>, %arg4: memref<16x1xf32, #tpu.memory_space<vmem>>, %arg5: memref<1x1xf32, #tpu.memory_space<vmem>>, %arg6: memref<1x128xf32, #tpu.memory_space<vmem>>) attributes {dimension_semantics = [#tpu.dimension_semantics<parallel>], iteration_bounds = array<i64: 1>, scalar_prefetch = 0 : i64, scratch_operands = 0 : i64, tpu.core_type = #tpu.core_type<tc>, window_params = [{transform_indices = @transform_0, window_bounds = array<i64: 2, 128>}, {pipeline_mode = #tpu.pipeline_mode<synchronous>, transform_indices = @transform_1, window_bounds = array<i64: 16, 2>}, {pipeline_mode = #tpu.pipeline_mode<synchronous>, transform_indices = @transform_2, window_bounds = array<i64: 16, 1>}, {pipeline_mode = #tpu.pipeline_mode<synchronous>, transform_indices = @transform_3, window_bounds = array<i64: 16, 1>}, {pipeline_mode = #tpu.pipeline_mode<synchronous>, transform_indices = @transform_4, window_bounds = array<i64: 1, 1>}, {transform_indices = @transform_5, window_bounds = array<i64: 1, 128>}]} {
    %c0 = arith.constant 0 : index
    %c0_0 = arith.constant 0 : index
    %0 = vector.load %arg2[%c0, %c0_0] : memref<16x2xf32, #tpu.memory_space<vmem>>, vector<16x2xf32>
    %c0_1 = arith.constant 0 : index
    %c0_2 = arith.constant 0 : index
    %1 = vector.load %arg1[%c0_1, %c0_2] : memref<2x128xf32, #tpu.memory_space<vmem>>, vector<2x128xf32>
    %cst = arith.constant dense<0.000000e+00> : vector<16x128xf32>
    %2 = tpu.matmul %0, %1, %cst {dimension_numbers = #tpu.dot_dimension_numbers<[1], [0], [0], [1], [0, 0, 1, 1], [], []>} : vector<16x2xf32>, vector<2x128xf32>, vector<16x128xf32> -> vector<16x128xf32>
    %c0_3 = arith.constant 0 : index
    %c0_4 = arith.constant 0 : index
    %3 = vector.load %arg3[%c0_3, %c0_4] : memref<16x1xf32, #tpu.memory_space<vmem>>, vector<16x1xf32>
    %4 = vector.broadcast %3 : vector<16x1xf32> to vector<16x128xf32>
    %5 = arith.addf %2, %4 : vector<16x128xf32>
    %cst_5 = arith.constant 0.000000e+00 : f32
    %6 = vector.broadcast %cst_5 : f32 to vector<16x128xf32>
    %7 = arith.maximumf %5, %6 : vector<16x128xf32>
    %c0_6 = arith.constant 0 : index
    %c0_7 = arith.constant 0 : index
    %8 = vector.load %arg4[%c0_6, %c0_7] : memref<16x1xf32, #tpu.memory_space<vmem>>, vector<16x1xf32>
    %9 = vector.broadcast %8 : vector<16x1xf32> to vector<16x128xf32>
    %10 = arith.mulf %7, %9 : vector<16x128xf32>
    %cst_8 = arith.constant dense<0.000000e+00> : vector<128xf32>
    %11 = vector.multi_reduction <add>, %10, %cst_8 [0] : vector<16x128xf32> to vector<128xf32>
    %12 = vector.shape_cast %11 : vector<128xf32> to vector<1x128xf32>
    %c0_9 = arith.constant 0 : index
    %c0_10 = arith.constant 0 : index
    %13 = vector.load %arg5[%c0_9, %c0_10] : memref<1x1xf32, #tpu.memory_space<vmem>>, vector<1x1xf32>
    %14 = vector.broadcast %13 : vector<1x1xf32> to vector<1x128xf32>
    %15 = arith.addf %12, %14 : vector<1x128xf32>
    %c0_11 = arith.constant 0 : index
    %c0_12 = arith.constant 0 : index
    %16 = vector.load %arg6[%c0_11, %c0_12] : memref<1x128xf32, #tpu.memory_space<vmem>>, vector<1x128xf32>
    tpu.vector_store %arg6[%c0_11, %c0_12], %15 {strides = array<i32>} : memref<1x128xf32, #tpu.memory_space<vmem>>, vector<1x128xf32>,
    return
  }
  func.func @transform_0(%arg0: i32) -> (i32, i32) {
    %c0_i32 = arith.constant 0 : i32
    %c0_i32_0 = arith.constant 0 : i32
    return %c0_i32, %arg0 : i32, i32
  }
  func.func @transform_1(%arg0: i32) -> (i32, i32) {
    %c0_i32 = arith.constant 0 : i32
    %c0_i32_0 = arith.constant 0 : i32
    %c0_i32_1 = arith.constant 0 : i32
    return %c0_i32, %c0_i32_0 : i32, i32
  }
  func.func @transform_2(%arg0: i32) -> (i32, i32) {
    %c0_i32 = arith.constant 0 : i32
    %c0_i32_0 = arith.constant 0 : i32
    %c0_i32_1 = arith.constant 0 : i32
    return %c0_i32, %c0_i32_0 : i32, i32
  }
  func.func @transform_3(%arg0: i32) -> (i32, i32) {
    %c0_i32 = arith.constant 0 : i32
    %c0_i32_0 = arith.constant 0 : i32
    %c0_i32_1 = arith.constant 0 : i32
    return %c0_i32, %c0_i32_0 : i32, i32
  }
  func.func @transform_4(%arg0: i32) -> (i32, i32) {
    %c0_i32 = arith.constant 0 : i32
    %c0_i32_0 = arith.constant 0 : i32
    %c0_i32_1 = arith.constant 0 : i32
    return %c0_i32, %c0_i32_0 : i32, i32
  }
  func.func @transform_5(%arg0: i32) -> (i32, i32) {
    %c0_i32 = arith.constant 0 : i32
    %c0_i32_0 = arith.constant 0 : i32
    return %c0_i32, %arg0 : i32, i32
  }
}

</mosaic_0001>

<llo_original>
// kernel: tpu_custom_call.1
$region0: #{tpu_custom_call.1}
  #allocation0 [shape = 'u32[]', space=smem, size = 0x4, offset = 0x4, fixed_abs, tag = 'smem constant byte address 0x4 - core index']
  #allocation1 [shape = 'u32[144,128]{1,0:T(1,128)}', space=vmem, size = 0x12000, scoped, tag = 'internal scratch']
  #allocation2 [shape = 'f32[1,1]{1,0:T(1,128)S(1)}', space=vmem, size = 0x200, scoped, tag = 'scoped memory for tpu_custom_call.1']
  %s0 = inlined_call_operand.vmem [shape: f32[2,128], index: 0, kind: input, shape index: {}]
  %s1 = inlined_call_operand.vmem [shape: f32[16,2], index: 1, kind: input, shape index: {}]
  %s2 = inlined_call_operand.vmem [shape: f32[16,1], index: 2, kind: input, shape index: {}]
  %s3 = inlined_call_operand.vmem [shape: f32[16,1], index: 3, kind: input, shape index: {}]
  %s4 = inlined_call_operand.<no memory space> [shape: f32[1,1], index: 4, kind: input, shape index: {}]
  %s5 = inlined_call_operand.hbm [shape: f32[1,128], index: 5, kind: output, shape index: {}]
  %s6 = sld [smem:[#allocation0]]
  $region30: #{tpu_custom_call.1} parent=0
    _
  %s8 = ssub.s32 1, %s6
  %s9 = scalar_select 0, %s8, %s6
  %v10 = vstv %s4
  %11 = vst [vmem:[#allocation2] sm:$0x1] %v10
  $region1: #{tpu_custom_call.1} parent=0
    #allocation3 [shape = 'u8[512]{0}', space=vmem, size = 0x400, scoped, tag = 'output window, operand 0, single buffered']
    #allocation4 [shape = 's32[1]{0}', space=sflag, size = 0x4, scoped, tag = 'scoped memory for tpu_custom_call.1']
    %12 = vsyncpa [#allocation4], 0
    // Predicated region
    $region2: #{tpu_custom_call.1} parent=1 // pred_check
      _
    $region3: #{tpu_custom_call.1} parent=1 // pred_check_branch
      %14 = sbr.rel (0) target = $region5
    $region4: #{tpu_custom_call.1} parent=1 // pred_region
      _
    $region5: #{tpu_custom_call.1} parent=1 // pred_fallthru
      _
    // Predicated region
    $region6: #{tpu_custom_call.1} parent=1 // pred_check
      _
    $region7: #{tpu_custom_call.1} parent=1 // pred_check_branch
      %16 = sbr.rel (0) target = $region9
    $region8: #{tpu_custom_call.1} parent=1 // pred_region
      _
    $region9: #{tpu_custom_call.1} parent=1 // pred_fallthru
      _
    // Predicated region
    $region10: #{tpu_custom_call.1} parent=1 // pred_check
      _
    $region11: #{tpu_custom_call.1} parent=1 // pred_check_branch
      %18 = sbr.rel (0) target = $region13
    $region12: #{tpu_custom_call.1} parent=1 // pred_region
      _
    $region13: #{tpu_custom_call.1} parent=1 // pred_fallthru
      _
    // Predicated region
    $region14: #{tpu_custom_call.1} parent=1 // pred_check
      _
    $region15: #{tpu_custom_call.1} parent=1 // pred_check_branch
      %20 = sbr.rel (0) target = $region17
    $region16: #{tpu_custom_call.1} parent=1 // pred_region
      _
    $region17: #{tpu_custom_call.1} parent=1 // pred_fallthru
      _
    // Predicated region
    $region18: #{tpu_custom_call.1} parent=1 // pred_check
      _
    $region19: #{tpu_custom_call.1} parent=1 // pred_check_branch
      %22 = sbr.rel (0) target = $region21
    $region20: #{tpu_custom_call.1} parent=1 // pred_region
      _
    $region21: #{tpu_custom_call.1} parent=1 // pred_fallthru
      _
    %v23 = vld [vmem:[%s1] sm:$0xff]
    %v24 = vld [vmem:[%s1 + $0x8] sm:$0xff]
    %v25 = vld [vmem:[%s0] sm:$0x3]
    %v26 = vld [vmem:[%s2] sm:$0xff]
    %v27 = vld [vmem:[%s2 + $0x8] sm:$0xff]
    %29 = vset.pattern.permute.xlu0 0
    %30 = vperm.xlu0 %29, %v26
    %v31 = vpop.permute.xlu0 %30
    %34 = vset.pattern.permute.xlu0 0
    %35 = vperm.xlu0 %34, %v27
    %v36 = vpop.permute.xlu0 %35
    %vm38 = vcmask 15360
    %v40 = vsel %vm38, %v23, 0
    %v43 = vsel %vm38, %v24, 0
    %vm45 = vcmask 1041408
    %v47 = vsel %vm45, %v25, 0
    %49 = vmatprep.subr.mxu0 0.0
    %50 = vmatpush1.msra.mxu0 %v47
    %51 = vmatprep.subr.mxu0 0.0
    %52 = vmatpush1.msra.mxu0 0.0
    %53 = vmatprep.subr.mxu0 0.0
    %54 = vmatpush1.msra.mxu0 0.0
    %55 = vmatprep.subr.mxu0 0.0
    %56 = vmatpush1.msra.mxu0 0.0
    %57 = vmatprep.subr.mxu0 0.0
    %58 = vmatpush1.msra.mxu0 0.0
    %59 = vmatprep.subr.mxu0 0.0
    %60 = vmatpush1.msra.mxu0 0.0
    %61 = vmatprep.subr.mxu0 0.0
    %62 = vmatpush1.msra.mxu0 0.0
    %63 = vmatprep.subr.mxu0 0.0
    %64 = vmatpush1.msra.mxu0 0.0
    %65 = vmatprep.subr.mxu0 0.0
    %66 = vmatpush1.msra.mxu0 0.0
    %67 = vmatprep.subr.mxu0 0.0
    %68 = vmatpush1.msra.mxu0 0.0
    %69 = vmatprep.subr.mxu0 0.0
    %70 = vmatpush1.msra.mxu0 0.0
    %71 = vmatprep.subr.mxu0 0.0
    %72 = vmatpush1.msra.mxu0 0.0
    %73 = vmatprep.subr.mxu0 0.0
    %74 = vmatpush1.msra.mxu0 0.0
    %75 = vmatprep.subr.mxu0 0.0
    %76 = vmatpush1.msra.mxu0 0.0
    %77 = vmatprep.subr.mxu0 0.0
    %78 = vmatpush1.msra.mxu0 0.0
    %79 = vmatprep.subr.mxu0 0.0
    %80 = vmatpush1.msra.mxu0 0.0
    %81 = vmatprep.subr.mxu0 0.0
    %82 = vmatpush1.msra.mxu0 0.0
    %83 = vmatprep.subr.mxu0 0.0
    %84 = vmatpush1.msra.mxu0 0.0
    %85 = vmatprep.subr.mxu0 0.0
    %86 = vmatpush1.msra.mxu0 0.0
    %87 = vmatprep.subr.mxu0 0.0
    %88 = vmatpush1.msra.mxu0 0.0
    %89 = vmatprep.subr.mxu0 0.0
    %90 = vmatpush1.msra.mxu0 0.0
    %91 = vmatprep.subr.mxu0 0.0
    %92 = vmatpush1.msra.mxu0 0.0
    %93 = vmatprep.subr.mxu0 0.0
    %94 = vmatpush1.msra.mxu0 0.0
    %95 = vmatprep.subr.mxu0 0.0
    %96 = vmatpush1.msra.mxu0 0.0
    %97 = vmatprep.subr.mxu0 0.0
    %98 = vmatpush1.msra.mxu0 0.0
    %99 = vmatprep.subr.mxu0 0.0
    %100 = vmatpush1.msra.mxu0 0.0
    %101 = vmatprep.subr.mxu0 0.0
    %102 = vmatpush1.msra.mxu0 0.0
    %103 = vmatprep.subr.mxu0 0.0
    %104 = vmatpush1.msra.mxu0 0.0
    %105 = vmatprep.subr.mxu0 0.0
    %106 = vmatpush1.msra.mxu0 0.0
    %107 = vmatprep.subr.mxu0 0.0
    %108 = vmatpush1.msra.mxu0 0.0
    %109 = vmatprep.subr.mxu0 0.0
    %110 = vmatpush1.msra.mxu0 0.0
    %111 = vmatprep.subr.mxu0 0.0
    %112 = vmatpush1.msra.mxu0 0.0
    %113 = vmatprep.mubr.f32.mxu0 0.0
    %114 = vmatmul.mubr.f32.gmra.mrb[0].mxu0 %v40
    %v115 = vpop.f32.mrb[0].mxu0
    %v116 = vadd.f32 %v31, %v115
    %v117 = vpop.f32.mrb[0].mxu0
    %118 = vmatprep.mubr.f32.mxu0 0.0
    %119 = vmatmul.mubr.f32.gmra.mrb[0].mxu0 %v43
    %v120 = vpop.f32.mrb[0].mxu0
    %v121 = vadd.f32 %v36, %v120
    %v122 = vpop.f32.mrb[0].mxu0
    %123 = vdwg.mxu0
    %v124 = vmax.f32 %v116, 0.0
    %v125 = vmax.f32 %v121, 0.0
    %v126 = vld [vmem:[%s3] sm:$0xff]
    %v127 = vld [vmem:[%s3 + $0x8] sm:$0xff]
    %129 = vset.pattern.permute.xlu0 0
    %130 = vperm.xlu0 %129, %v126
    %v131 = vpop.permute.xlu0 %130
    %134 = vset.pattern.permute.xlu0 0
    %135 = vperm.xlu0 %134, %v127
    %v136 = vpop.permute.xlu0 %135
    %v138 = vmul.f32 %v124, %v131
    %v139 = vmul.f32 %v125, %v136
    %v140 = vadd.f32 %v138, %v139
    %v141 = vrot.slane %v140, 4
    %v142 = vadd.f32 %v140, %v141
    %v143 = vrot.slane %v142, 2
    %v144 = vadd.f32 %v142, %v143
    %v145 = vrot.slane %v144, 1
    %v146 = vadd.f32 %v144, %v145
    %v147 = vld [vmem:[#allocation2] sm:$0x1]
    %149 = vset.pattern.permute.xlu0 0
    %150 = vperm.xlu0 %149, %v147
    %v151 = vpop.permute.xlu0 %150
    %v153 = vlaneseq
    %v154 = vshrl.u32 %v153, 7
    %v155 = vsub.s32 0, %v154
    %v156 = vrot.slane %v151, %v155
    %v157 = vadd.f32 %v146, %v156
    %158 = vst [vmem:[#allocation3] sm:$0x1] %v157
    // Predicated region
    $region22: #{tpu_custom_call.1} parent=1 // pred_check
      _
    $region23: #{tpu_custom_call.1} parent=1 // pred_check_branch
      %160 = sbr.rel (0) target = $region25
    $region24: #{tpu_custom_call.1} parent=1 // pred_region
      %s162 = ssub.s32 16, 16
      %163 = vsyncadd [#allocation4], %s162
      %s165 = sshll.u32 [#allocation3], 4
      %s166 = int_to_ptr.vmem [resolvable:$true] %s165
      %168 = dma.vmem_to_hbm [thread:$0]  %s166, 16, %s5, [#allocation4]
    $region25: #{tpu_custom_call.1} parent=1 // pred_fallthru
      _
    // Predicated region
    $region26: #{tpu_custom_call.1} parent=1 // pred_check
      _
    $region27: #{tpu_custom_call.1} parent=1 // pred_check_branch
      %170 = sbr.rel (0) target = $region29
    $region28: #{tpu_custom_call.1} parent=1 // pred_region
      %171 = dma.done [#allocation4], 16
    $region29: #{tpu_custom_call.1} parent=1 // pred_fallthru
      _
    %172 = vsyncpa [#allocation4], 1

</llo_original>
